<compile_context>
chip_gen: v7x
topology: tpu7x:2x2x1
jax: 0.10.0
libtpu: 0.0.40
codegen_flags: <defaults>
</compile_context>

<pallas_src>
import functools

import jax
import jax.numpy as jnp
from jax.experimental import pallas as pl
from jax.experimental.pallas import tpu as pltpu


def _pred_kernel(x_ref, w1_ref, b1_ref, w2_ref, b2_ref, o_ref, *, mm_dtype):
    # In-kernel cast of the x row tile (no wrapper-side pass over x).
    x = x_ref[...].astype(mm_dtype)
    # projection: x @ W1 (MXU, f32 accumulation)
    proj = jnp.dot(x, w1_ref[...], preferred_element_type=jnp.float32)
    # bias + tanh in f32 (VPU/EUP)
    h = jnp.tanh(proj + b1_ref[...])                 # b1 is (1, H_pad) -> broadcasts
    # dropout: identity in eval mode
    # TODO(synk): training-mode dropout would use pltpu.prng_seed / prng_random_bits.
    # fc: h @ W2 + b2 (cast h for the MXU, accumulate in f32)
    out = jnp.dot(h.astype(mm_dtype), w2_ref[...],
                  preferred_element_type=jnp.float32)
    # Emit final dtype directly; padded rows of the ragged last block are masked.
    o_ref[...] = (out + b2_ref[...]).astype(o_ref.dtype)


def _round_up(x, m):
    return ((x + m - 1) // m) * m


@functools.partial(jax.jit, static_argnames=("block_rows", "use_bf16"))
def prediction_layer(x, w1, b1, w2, b2, *, block_rows=256, use_bf16=True):
    """x: [N, E], w1: [E, H], b1: [H], w2: [H, O], b2: [O] -> [N, O]."""
    n, e = x.shape
    h = w1.shape[1]
    o = w2.shape[1]

    mm_dtype = jnp.bfloat16 if use_bf16 else jnp.float32
    sublane = 16 if use_bf16 else 8
    out_dtype = x.dtype

    # Lane-dense intermediates and output: pad H and O up to multiples of 128.
    h_pad = _round_up(h, 128)
    o_pad = _round_up(o, 128)

    # Row tile: big enough to feed the MXU, but aim for >= 2 grid steps so both
    # v7x TensorCores get work; always a sublane multiple. Pallas pads the ragged
    # last block (masked stores), so no explicit row padding is needed.
    bm = min(block_rows, _round_up(pl.cdiv(n, 2), sublane))
    bm = max(bm, sublane)
    grid_rows = pl.cdiv(n, bm)

    # Weights / biases: one-time cast + zero-pad (tiny vs. the x stream).
    w1_p = w1.astype(mm_dtype)
    b1_p = b1.astype(jnp.float32)
    w2_p = w2.astype(mm_dtype)
    b2_p = b2.astype(jnp.float32)
    if h_pad != h:
        w1_p = jnp.pad(w1_p, ((0, 0), (0, h_pad - h)))
        b1_p = jnp.pad(b1_p, ((0, h_pad - h),))
        w2_p = jnp.pad(w2_p, ((0, h_pad - h), (0, 0)))   # zero rows -> exact result
    if o_pad != o:
        w2_p = jnp.pad(w2_p, ((0, 0), (0, o_pad - o)))
        b2_p = jnp.pad(b2_p, ((0, o_pad - o),))
    b1_2d = b1_p.reshape(1, h_pad)
    b2_2d = b2_p.reshape(1, o_pad)

    # VMEM footprint (weights are VMEM-resident but still double-buffered by the
    # default pipeline; x/out row tiles double-buffered; f32 intermediates).
    x_bytes = jnp.dtype(x.dtype).itemsize
    out_bytes = jnp.dtype(out_dtype).itemsize
    mm_bytes = jnp.dtype(mm_dtype).itemsize
    weight_bytes = (e * h_pad + h_pad * o_pad) * mm_bytes + (h_pad + o_pad) * 4
    vmem_budget = (
        2 * weight_bytes
        + 2 * bm * e * x_bytes
        + 2 * bm * o_pad * out_bytes
        + bm * h_pad * (4 + 4 + mm_bytes)     # proj f32, tanh f32, bf16 copy for dot
        + bm * o_pad * 4                      # f32 accumulator of the second dot
    )
    vmem_limit = int(min(64 * 1024 * 1024, max(2 * vmem_budget, 16 * 1024 * 1024)))
    # NOTE: for very large E/H (weights alone near the limit) add a K-tiling grid
    # axis or drop the redundant weight buffer (pipeline_mode=pl.Buffered(1)).

    cost = pl.CostEstimate(
        flops=2 * n * (e * h_pad + h_pad * o_pad),
        transcendentals=n * h_pad,
        bytes_accessed=n * e * x_bytes + weight_bytes + n * o_pad * out_bytes,
    )

    out = pl.pallas_call(
        functools.partial(_pred_kernel, mm_dtype=mm_dtype),
        out_shape=jax.ShapeDtypeStruct((n, o_pad), out_dtype),
        grid_spec=pl.GridSpec(
            grid=(grid_rows,),
            in_specs=[
                pl.BlockSpec((bm, e), lambda i: (i, 0)),        # x row tile (streamed)
                pl.BlockSpec((e, h_pad), lambda i: (0, 0)),     # W1 (whole, resident)
                pl.BlockSpec((1, h_pad), lambda i: (0, 0)),     # b1
                pl.BlockSpec((h_pad, o_pad), lambda i: (0, 0)), # W2 (whole, resident)
                pl.BlockSpec((1, o_pad), lambda i: (0, 0)),     # b2
            ],
            out_specs=pl.BlockSpec((bm, o_pad), lambda i: (i, 0)),
        ),
        compiler_params=pltpu.CompilerParams(
            dimension_semantics=("parallel",),                  # megacore-friendly
            vmem_limit_bytes=vmem_limit,
        ),
        cost_estimate=cost,
    )(x, w1_p, b1_2d, w2_p, b2_2d)

    # Only the lane-padding columns need slicing; rows/dtype already final.
    return out[:, :o]


def init_params(key, embedding_dim, hidden_dim, output_dim, dtype=jnp.float32):
    """Deterministic init mimicking nn.Linear's U(-1/sqrt(fan_in), 1/sqrt(fan_in))."""
    k1, k2, k3, k4 = jax.random.split(key, 4)
    lim1 = 1.0 / (embedding_dim ** 0.5)
    lim2 = 1.0 / (hidden_dim ** 0.5)
    # store weights pre-transposed: [in, out]
    w1 = jax.random.uniform(k1, (embedding_dim, hidden_dim), dtype, -lim1, lim1)
    b1 = jax.random.uniform(k2, (hidden_dim,), dtype, -lim1, lim1)
    w2 = jax.random.uniform(k3, (hidden_dim, output_dim), dtype, -lim2, lim2)
    b2 = jax.random.uniform(k4, (output_dim,), dtype, -lim2, lim2)
    return w1, b1, w2, b2


if __name__ == "__main__":
    embedding_dim, hidden_dim, output_dim = 32, 64, 8
    batch = 16

    key = jax.random.PRNGKey(0)
    kx, kp = jax.random.split(key)
    x = jax.random.normal(kx, (batch, embedding_dim), jnp.float32)
    w1, b1, w2, b2 = init_params(kp, embedding_dim, hidden_dim, output_dim)

    # reference in plain JAX (dropout is identity in eval mode)
    ref = jnp.tanh(x @ w1 + b1) @ w2 + b2

    # bf16-MXU path (default): loose tolerance due to bf16 operands / f32 accum.
    out = jax.block_until_ready(prediction_layer(x, w1, b1, w2, b2))
    assert out.shape == (batch, output_dim)
    assert jnp.allclose(out, ref, atol=5e-2, rtol=5e-2)

    # f32 precision path for precision-sensitive consumers: tight tolerance.
    out_f32 = jax.block_until_ready(
        prediction_layer(x, w1, b1, w2, b2, use_bf16=False))
    assert out_f32.shape == (batch, output_dim)
    assert jnp.allclose(out_f32, ref, atol=1e-4, rtol=1e-4)

    print("KERNEL_OK")
</pallas_src>

<mosaic_0001>
module attributes {stable_mosaic.version = 11 : i64} {
  func.func @_pred_kernel(%arg0: i32, %arg1: memref<16x32xf32, #tpu.memory_space<vmem>>, %arg2: memref<32x128xbf16, #tpu.memory_space<vmem>>, %arg3: memref<1x128xf32, #tpu.memory_space<vmem>>, %arg4: memref<128x128xbf16, #tpu.memory_space<vmem>>, %arg5: memref<1x128xf32, #tpu.memory_space<vmem>>, %arg6: memref<16x128xf32, #tpu.memory_space<vmem>>) attributes {dimension_semantics = [#tpu.dimension_semantics<parallel>], iteration_bounds = array<i64: 1>, scalar_prefetch = 0 : i64, scratch_operands = 0 : i64, tpu.core_type = #tpu.core_type<tc>, window_params = [{transform_indices = @transform_0, window_bounds = array<i64: 16, 32>}, {pipeline_mode = #tpu.pipeline_mode<synchronous>, transform_indices = @transform_1, window_bounds = array<i64: 32, 128>}, {pipeline_mode = #tpu.pipeline_mode<synchronous>, transform_indices = @transform_2, window_bounds = array<i64: 1, 128>}, {pipeline_mode = #tpu.pipeline_mode<synchronous>, transform_indices = @transform_3, window_bounds = array<i64: 128, 128>}, {pipeline_mode = #tpu.pipeline_mode<synchronous>, transform_indices = @transform_4, window_bounds = array<i64: 1, 128>}, {transform_indices = @transform_5, window_bounds = array<i64: 16, 128>}]} {
    %c0 = arith.constant 0 : index
    %c0_0 = arith.constant 0 : index
    %0 = vector.load %arg1[%c0, %c0_0] : memref<16x32xf32, #tpu.memory_space<vmem>>, vector<16x32xf32>
    %1 = arith.truncf %0 : vector<16x32xf32> to vector<16x32xbf16>
    %c0_1 = arith.constant 0 : index
    %c0_2 = arith.constant 0 : index
    %2 = vector.load %arg2[%c0_1, %c0_2] : memref<32x128xbf16, #tpu.memory_space<vmem>>, vector<32x128xbf16>
    %cst = arith.constant dense<0.000000e+00> : vector<16x128xf32>
    %3 = tpu.matmul %1, %2, %cst {dimension_numbers = #tpu.dot_dimension_numbers<[1], [0], [0], [1], [0, 0, 1, 1], [], []>} : vector<16x32xbf16>, vector<32x128xbf16>, vector<16x128xf32> -> vector<16x128xf32>
    %c0_3 = arith.constant 0 : index
    %c0_4 = arith.constant 0 : index
    %4 = vector.load %arg3[%c0_3, %c0_4] : memref<1x128xf32, #tpu.memory_space<vmem>>, vector<1x128xf32>
    %5 = vector.broadcast %4 : vector<1x128xf32> to vector<16x128xf32>
    %6 = arith.addf %3, %5 : vector<16x128xf32>
    %7 = math.tanh %6 : vector<16x128xf32>
    %8 = arith.truncf %7 : vector<16x128xf32> to vector<16x128xbf16>
    %c0_5 = arith.constant 0 : index
    %c0_6 = arith.constant 0 : index
    %9 = vector.load %arg4[%c0_5, %c0_6] : memref<128x128xbf16, #tpu.memory_space<vmem>>, vector<128x128xbf16>
    %cst_7 = arith.constant dense<0.000000e+00> : vector<16x128xf32>
    %10 = tpu.matmul %8, %9, %cst_7 {dimension_numbers = #tpu.dot_dimension_numbers<[1], [0], [0], [1], [0, 0, 1, 1], [], []>} : vector<16x128xbf16>, vector<128x128xbf16>, vector<16x128xf32> -> vector<16x128xf32>
    %c0_8 = arith.constant 0 : index
    %c0_9 = arith.constant 0 : index
    %11 = vector.load %arg5[%c0_8, %c0_9] : memref<1x128xf32, #tpu.memory_space<vmem>>, vector<1x128xf32>
    %12 = vector.broadcast %11 : vector<1x128xf32> to vector<16x128xf32>
    %13 = arith.addf %10, %12 : vector<16x128xf32>
    %c0_10 = arith.constant 0 : index
    %c0_11 = arith.constant 0 : index
    %14 = vector.load %arg6[%c0_10, %c0_11] : memref<16x128xf32, #tpu.memory_space<vmem>>, vector<16x128xf32>
    tpu.vector_store %arg6[%c0_10, %c0_11], %13 {strides = array<i32>} : memref<16x128xf32, #tpu.memory_space<vmem>>, vector<16x128xf32>,
    return
  }
  func.func @transform_0(%arg0: i32) -> (i32, i32) {
    %c0_i32 = arith.constant 0 : i32
    %c0_i32_0 = arith.constant 0 : i32
    return %arg0, %c0_i32 : i32, i32
  }
  func.func @transform_1(%arg0: i32) -> (i32, i32) {
    %c0_i32 = arith.constant 0 : i32
    %c0_i32_0 = arith.constant 0 : i32
    %c0_i32_1 = arith.constant 0 : i32
    return %c0_i32, %c0_i32_0 : i32, i32
  }
  func.func @transform_2(%arg0: i32) -> (i32, i32) {
    %c0_i32 = arith.constant 0 : i32
    %c0_i32_0 = arith.constant 0 : i32
    %c0_i32_1 = arith.constant 0 : i32
    return %c0_i32, %c0_i32_0 : i32, i32
  }
  func.func @transform_3(%arg0: i32) -> (i32, i32) {
    %c0_i32 = arith.constant 0 : i32
    %c0_i32_0 = arith.constant 0 : i32
    %c0_i32_1 = arith.constant 0 : i32
    return %c0_i32, %c0_i32_0 : i32, i32
  }
  func.func @transform_4(%arg0: i32) -> (i32, i32) {
    %c0_i32 = arith.constant 0 : i32
    %c0_i32_0 = arith.constant 0 : i32
    %c0_i32_1 = arith.constant 0 : i32
    return %c0_i32, %c0_i32_0 : i32, i32
  }
  func.func @transform_5(%arg0: i32) -> (i32, i32) {
    %c0_i32 = arith.constant 0 : i32
    %c0_i32_0 = arith.constant 0 : i32
    return %arg0, %c0_i32 : i32, i32
  }
}

</mosaic_0001>

<llo_original>
// kernel: prediction_layer.1
$region0: #{prediction_layer.1}
  #allocation0 [shape = 'u32[]', space=smem, size = 0x4, offset = 0x4, fixed_abs, tag = 'smem constant byte address 0x4 - core index']
  #allocation1 [shape = 'u32[144,128]{1,0:T(1,128)}', space=vmem, size = 0x12000, scoped, tag = 'internal scratch']
  %s0 = inlined_call_operand.vmem [shape: f32[16,32], index: 0, kind: input, shape index: {}]
  %s1 = inlined_call_operand.vmem [shape: bf16[32,128], index: 1, kind: input, shape index: {}]
  %s2 = inlined_call_operand.vmem [shape: f32[1,128], index: 2, kind: input, shape index: {}]
  %s3 = inlined_call_operand.vmem [shape: bf16[128,128], index: 3, kind: input, shape index: {}]
  %s4 = inlined_call_operand.vmem [shape: f32[1,128], index: 4, kind: input, shape index: {}]
  %s5 = inlined_call_operand.vmem [shape: f32[16,128], index: 5, kind: output, shape index: {}]
  %s6 = sld [smem:[#allocation0]]
  $region30: #{prediction_layer.1} parent=0
    _
  %s8 = ssub.s32 1, %s6
  %s9 = scalar_select 0, %s8, %s6
  // Predicated region
  $region2: #{prediction_layer.1} parent=0 // pred_check
    _
  $region3: #{prediction_layer.1} parent=0 // pred_check_branch
    %11 = sbr.rel (0) target = $region5
  $region4: #{prediction_layer.1} parent=0 // pred_region
    _
  $region5: #{prediction_layer.1} parent=0 // pred_fallthru
    _
  // Predicated region
  $region6: #{prediction_layer.1} parent=0 // pred_check
    _
  $region7: #{prediction_layer.1} parent=0 // pred_check_branch
    %13 = sbr.rel (0) target = $region9
  $region8: #{prediction_layer.1} parent=0 // pred_region
    _
  $region9: #{prediction_layer.1} parent=0 // pred_fallthru
    _
  // Predicated region
  $region10: #{prediction_layer.1} parent=0 // pred_check
    _
  $region11: #{prediction_layer.1} parent=0 // pred_check_branch
    %15 = sbr.rel (0) target = $region13
  $region12: #{prediction_layer.1} parent=0 // pred_region
    _
  $region13: #{prediction_layer.1} parent=0 // pred_fallthru
    _
  // Predicated region
  $region14: #{prediction_layer.1} parent=0 // pred_check
    _
  $region15: #{prediction_layer.1} parent=0 // pred_check_branch
    %17 = sbr.rel (0) target = $region17
  $region16: #{prediction_layer.1} parent=0 // pred_region
    _
  $region17: #{prediction_layer.1} parent=0 // pred_fallthru
    _
  // Predicated region
  $region18: #{prediction_layer.1} parent=0 // pred_check
    _
  $region19: #{prediction_layer.1} parent=0 // pred_check_branch
    %19 = sbr.rel (0) target = $region21
  $region20: #{prediction_layer.1} parent=0 // pred_region
    _
  $region21: #{prediction_layer.1} parent=0 // pred_fallthru
    _
  %v21 = vld [vmem:[%s0] sm:$0xff]
  %v22 = vld [vmem:[%s0 + $0x8] sm:$0xff]
  %v23 = vpack.c.bf16 %v22, %v21
  %v24 = vld [vmem:[%s1] sm:$0xf]
  %v25 = vld [vmem:[%s1 + $0x4] sm:$0xf]
  %v26 = vld [vmem:[%s1 + $0x8] sm:$0xf]
  %v27 = vld [vmem:[%s1 + $0xc] sm:$0xf]
  %v28 = vld [vmem:[%s2] sm:$0x1]
  %v30 = vlaneseq
  %v31 = vshrl.u32 %v30, 7
  %v32 = vsub.s32 0, %v31
  %v33 = vrot.slane %v28, %v32
  %v39 = vunpack.c.l.b16 %v24
  %v40 = vunpack.c.l.b16 %v25
  %v41 = vunpack.c.l.b16 %v26
  %v42 = vunpack.c.l.b16 %v27
  %v43 = vpack.c.b16 %v40, %v39
  %v44 = vpack.c.b16 %v42, %v41
  %vm47 = vcmask 261120
  %v49 = vsel %vm47, %v23, 0
  %51 = vmatprep.subr.bf16.mxu0 0
  %52 = vmatpush1.bf16.msra.mxu0 %v43
  %53 = vmatprep.subr.bf16.mxu0 0
  %54 = vmatpush1.bf16.msra.mxu0 %v44
  %55 = vmatprep.subr.bf16.mxu0 0
  %56 = vmatpush1.bf16.msra.mxu0 0
  %57 = vmatprep.subr.bf16.mxu0 0
  %58 = vmatpush1.bf16.msra.mxu0 0
  %59 = vmatprep.subr.bf16.mxu0 0
  %60 = vmatpush1.bf16.msra.mxu0 0
  %61 = vmatprep.subr.bf16.mxu0 0
  %62 = vmatpush1.bf16.msra.mxu0 0
  %63 = vmatprep.subr.bf16.mxu0 0
  %64 = vmatpush1.bf16.msra.mxu0 0
  %65 = vmatprep.subr.bf16.mxu0 0
  %66 = vmatpush1.bf16.msra.mxu0 0
  %67 = vmatprep.subr.bf16.mxu0 0
  %68 = vmatpush1.bf16.msra.mxu0 0
  %69 = vmatprep.subr.bf16.mxu0 0
  %70 = vmatpush1.bf16.msra.mxu0 0
  %71 = vmatprep.subr.bf16.mxu0 0
  %72 = vmatpush1.bf16.msra.mxu0 0
  %73 = vmatprep.subr.bf16.mxu0 0
  %74 = vmatpush1.bf16.msra.mxu0 0
  %75 = vmatprep.subr.bf16.mxu0 0
  %76 = vmatpush1.bf16.msra.mxu0 0
  %77 = vmatprep.subr.bf16.mxu0 0
  %78 = vmatpush1.bf16.msra.mxu0 0
  %79 = vmatprep.subr.bf16.mxu0 0
  %80 = vmatpush1.bf16.msra.mxu0 0
  %81 = vmatprep.subr.bf16.mxu0 0
  %82 = vmatpush1.bf16.msra.mxu0 0
  %83 = vmatprep.mubr.bf16.mxu0 0
  %84 = vmatmul.mubr.bf16.gmra.mrb[0].mxu0 %v49
  %v85 = vpop.f32.mrb[0].mxu0
  %v86 = vadd.f32 %v33, %v85
  %v87 = vpop.f32.mrb[0].mxu0
  %v88 = vpop.f32.mrb[0].mxu0
  %v89 = vadd.f32 %v33, %v88
  %v90 = vpop.f32.mrb[0].mxu0
  %91 = vdwg.mxu0
  %v92 = vtanh.pop %v86
  %v93 = vtanh.pop %v89
  %v94 = vpack.c.bf16 %v93, %v92
  %v95 = vld [vmem:[%s3] sm:$0xf]
  %v96 = vld [vmem:[%s3 + $0x4] sm:$0xf]
  %v97 = vld [vmem:[%s3 + $0x8] sm:$0xf]
  %v98 = vld [vmem:[%s3 + $0xc] sm:$0xf]
  %v99 = vld [vmem:[%s3 + $0x10] sm:$0xf]
  %v100 = vld [vmem:[%s3 + $0x14] sm:$0xf]
  %v101 = vld [vmem:[%s3 + $0x18] sm:$0xf]
  %v102 = vld [vmem:[%s3 + $0x1c] sm:$0xf]
  %v103 = vld [vmem:[%s3 + $0x20] sm:$0xf]
  %v104 = vld [vmem:[%s3 + $0x24] sm:$0xf]
  %v105 = vld [vmem:[%s3 + $0x28] sm:$0xf]
  %v106 = vld [vmem:[%s3 + $0x2c] sm:$0xf]
  %v107 = vld [vmem:[%s3 + $0x30] sm:$0xf]
  %v108 = vld [vmem:[%s3 + $0x34] sm:$0xf]
  %v109 = vld [vmem:[%s3 + $0x38] sm:$0xf]
  %v110 = vld [vmem:[%s3 + $0x3c] sm:$0xf]
  %v111 = vld [vmem:[%s4] sm:$0x1]
  %v113 = vlaneseq
  %v114 = vshrl.u32 %v113, 7
  %v115 = vsub.s32 0, %v114
  %v116 = vrot.slane %v111, %v115
  %v134 = vunpack.c.l.b16 %v95
  %v135 = vunpack.c.l.b16 %v96
  %v136 = vunpack.c.l.b16 %v97
  %v137 = vunpack.c.l.b16 %v98
  %v138 = vunpack.c.l.b16 %v99
  %v139 = vunpack.c.l.b16 %v100
  %v140 = vunpack.c.l.b16 %v101
  %v141 = vunpack.c.l.b16 %v102
  %v142 = vunpack.c.l.b16 %v103
  %v143 = vunpack.c.l.b16 %v104
  %v144 = vunpack.c.l.b16 %v105
  %v145 = vunpack.c.l.b16 %v106
  %v146 = vunpack.c.l.b16 %v107
  %v147 = vunpack.c.l.b16 %v108
  %v148 = vunpack.c.l.b16 %v109
  %v149 = vunpack.c.l.b16 %v110
  %v150 = vpack.c.b16 %v135, %v134
  %v151 = vpack.c.b16 %v137, %v136
  %v152 = vpack.c.b16 %v139, %v138
  %v153 = vpack.c.b16 %v141, %v140
  %v154 = vpack.c.b16 %v143, %v142
  %v155 = vpack.c.b16 %v145, %v144
  %v156 = vpack.c.b16 %v147, %v146
  %v157 = vpack.c.b16 %v149, %v148
  %166 = vmatprep.subr.bf16.mxu0 0
  %167 = vmatpush1.bf16.msra.mxu0 %v150
  %168 = vmatprep.subr.bf16.mxu0 0
  %169 = vmatpush1.bf16.msra.mxu0 %v151
  %170 = vmatprep.subr.bf16.mxu0 0
  %171 = vmatpush1.bf16.msra.mxu0 %v152
  %172 = vmatprep.subr.bf16.mxu0 0
  %173 = vmatpush1.bf16.msra.mxu0 %v153
  %174 = vmatprep.subr.bf16.mxu0 0
  %175 = vmatpush1.bf16.msra.mxu0 %v154
  %176 = vmatprep.subr.bf16.mxu0 0
  %177 = vmatpush1.bf16.msra.mxu0 %v155
  %178 = vmatprep.subr.bf16.mxu0 0
  %179 = vmatpush1.bf16.msra.mxu0 %v156
  %180 = vmatprep.subr.bf16.mxu0 0
  %181 = vmatpush1.bf16.msra.mxu0 %v157
  %182 = vmatprep.subr.bf16.mxu0 0
  %183 = vmatpush1.bf16.msra.mxu0 0
  %184 = vmatprep.subr.bf16.mxu0 0
  %185 = vmatpush1.bf16.msra.mxu0 0
  %186 = vmatprep.subr.bf16.mxu0 0
  %187 = vmatpush1.bf16.msra.mxu0 0
  %188 = vmatprep.subr.bf16.mxu0 0
  %189 = vmatpush1.bf16.msra.mxu0 0
  %190 = vmatprep.subr.bf16.mxu0 0
  %191 = vmatpush1.bf16.msra.mxu0 0
  %192 = vmatprep.subr.bf16.mxu0 0
  %193 = vmatpush1.bf16.msra.mxu0 0
  %194 = vmatprep.subr.bf16.mxu0 0
  %195 = vmatpush1.bf16.msra.mxu0 0
  %196 = vmatprep.subr.bf16.mxu0 0
  %197 = vmatpush1.bf16.msra.mxu0 0
  %198 = vmatprep.mubr.bf16.mxu0 0
  %199 = vmatmul.mubr.bf16.gmra.mrb[0].mxu0 %v94
  %v200 = vpop.f32.mrb[0].mxu0
  %v201 = vadd.f32 %v116, %v200
  %v202 = vpop.f32.mrb[0].mxu0
  %v203 = vpop.f32.mrb[0].mxu0
  %v204 = vadd.f32 %v116, %v203
  %v205 = vpop.f32.mrb[0].mxu0
  %206 = vdwg.mxu0
  %207 = vst [vmem:[%s5] sm:$0xff] %v201
  %208 = vst [vmem:[%s5 + $0x8] sm:$0xff] %v204
  // Predicated region
  $region22: #{prediction_layer.1} parent=0 // pred_check
    _
  $region23: #{prediction_layer.1} parent=0 // pred_check_branch
    %210 = sbr.rel (0) target = $region25
  $region24: #{prediction_layer.1} parent=0 // pred_region
    _
  $region25: #{prediction_layer.1} parent=0 // pred_fallthru
    _
  // Predicated region
  $region26: #{prediction_layer.1} parent=0 // pred_check
    _
  $region27: #{prediction_layer.1} parent=0 // pred_check_branch
    %212 = sbr.rel (0) target = $region29
  $region28: #{prediction_layer.1} parent=0 // pred_region
    _
  $region29: #{prediction_layer.1} parent=0 // pred_fallthru
    _

</llo_original>
